<compile_context>
chip_gen: v6e
topology: v6e:2x2x1
jax: 0.10.0
libtpu: 0.0.40
codegen_flags: <defaults>
</compile_context>

<pallas_src>
import jax
import jax.numpy as jnp
from jax import lax
from jax.experimental import pallas as pl
from jax.experimental.pallas import tpu as pltpu

N = 8          # rows per sample after squeeze(0) (example size; any N works)
F_IN = 2
F_HID = 3
F_OUT = 2
K_PAD = 8      # contraction padding = f32 sublane tile
LANE = 128     # lane padding for hidden / output feature dims


def mixing_kernel(x_ref, w1_ref, b1_ref, w2_ref, b2_ref, o_ref):
    # x_ref:  (1, N, K_PAD)   one sample, input features zero-padded to 8 lanes
    # w1_ref: (K_PAD, LANE)   hidden weight (in x out layout), zero-padded
    # b1_ref: (1, LANE)       hidden bias, zero-padded
    # w2_ref: (K_PAD, LANE)   output weight (in x out layout), zero-padded
    # b2_ref: (1, LANE)       output bias, zero-padded
    # o_ref:  (1, N, LANE)    per-sample softmax output (lane-dense store)
    x = x_ref[0]                                                   # (N, 8)

    # hidden linear: (N, 8) @ (8, 128) -> (N, 128); lanes >= F_HID stay exactly 0
    h = jnp.dot(x, w1_ref[...], preferred_element_type=jnp.float32) + b1_ref[...]

    # cat(h[0:1], tanh(h[1:]), dim=0): tanh on every row except row 0
    rows = lax.broadcasted_iota(jnp.int32, h.shape, 0)
    h = jnp.where(rows >= 1, jnp.tanh(h), h)

    # output linear: only the first 8 hidden lanes carry signal (3 real + 5 zero),
    # so contract just those against the (8, 128) weight tile.
    o = (jnp.dot(h[:, :K_PAD], w2_ref[...], preferred_element_type=jnp.float32)
         + b2_ref[...])                                            # (N, 128)

    # Softmax over dim 0 (across rows, independently per column)
    m = jnp.max(o, axis=0, keepdims=True)
    e = jnp.exp(o - m)
    s = jnp.sum(e, axis=0, keepdims=True)
    o_ref[0] = e * pl.reciprocal(s, approx=False)


def pad_params(w1, b1, w2, b2):
    """Build TPU-padded parameters ONCE (cache and reuse across forwards).

    w1: (3, 2) torch Linear weight, b1: (3,), w2: (2, 3) weight, b2: (2,)."""
    w1p = jnp.zeros((K_PAD, LANE), jnp.float32).at[:F_IN, :F_HID].set(w1.T)
    b1p = jnp.zeros((1, LANE), jnp.float32).at[0, :F_HID].set(b1)
    w2p = jnp.zeros((K_PAD, LANE), jnp.float32).at[:F_HID, :F_OUT].set(w2.T)
    b2p = jnp.zeros((1, LANE), jnp.float32).at[0, :F_OUT].set(b2)
    return w1p, b1p, w2p, b2p


@jax.jit
def mixing_network_forward_batched(xb, padded_params):
    """xb: (B, N, 2) = B independent (N, 2) inputs. Returns (B, N, 2)."""
    w1p, b1p, w2p, b2p = padded_params
    bsz, n, _ = xb.shape
    xp = jnp.pad(xb.astype(jnp.float32), ((0, 0), (0, 0), (0, K_PAD - F_IN)))

    out = pl.pallas_call(
        mixing_kernel,
        out_shape=jax.ShapeDtypeStruct((bsz, n, LANE), jnp.float32),
        grid=(bsz,),
        in_specs=[
            pl.BlockSpec((1, n, K_PAD), lambda b: (b, 0, 0)),   # x: one sample/step
            pl.BlockSpec((K_PAD, LANE), lambda b: (0, 0)),      # w1: VMEM-resident
            pl.BlockSpec((1, LANE), lambda b: (0, 0)),          # b1: VMEM-resident
            pl.BlockSpec((K_PAD, LANE), lambda b: (0, 0)),      # w2: VMEM-resident
            pl.BlockSpec((1, LANE), lambda b: (0, 0)),          # b2: VMEM-resident
        ],
        out_specs=pl.BlockSpec((1, n, LANE), lambda b: (b, 0, 0)),
        compiler_params=pltpu.CompilerParams(
            dimension_semantics=("parallel",)),
    )(xp, w1p, b1p, w2p, b2p)

    return out[:, :, :F_OUT]


def mixing_network_forward(x, padded_params):
    """Module semantics: x (1, N, 2) -> (N, 2)."""
    return mixing_network_forward_batched(x, padded_params)[0]


def reference_forward(x, w1, b1, w2, b2):
    """Pure-JAX reference mirroring the PyTorch forward (x: (1, N, 2))."""
    xs = jnp.squeeze(x, axis=0)
    h = xs @ w1.T + b1
    h = jnp.concatenate([h[0:1], jnp.tanh(h[1:])], axis=0)
    o = h @ w2.T + b2
    return jax.nn.softmax(o, axis=0)


if __name__ == "__main__":
    key = jax.random.PRNGKey(0)
    kx, kb, k1, k2, k3, k4 = jax.random.split(key, 6)

    # PyTorch Linear-shaped parameters:
    #   hidden.weight (3, 2), hidden.bias (3,), output.weight (2, 3), output.bias (2,)
    w1 = jax.random.uniform(k1, (F_HID, F_IN), jnp.float32, -0.5, 0.5)
    b1 = jax.random.uniform(k2, (F_HID,), jnp.float32, -0.5, 0.5)
    w2 = jax.random.uniform(k3, (F_OUT, F_HID), jnp.float32, -0.5, 0.5)
    b2 = jax.random.uniform(k4, (F_OUT,), jnp.float32, -0.5, 0.5)

    # Padded parameters built once (hoisted out of the per-call path).
    padded_params = pad_params(w1, b1, w2, b2)

    # --- single sample, module semantics: x (1, N, 2) -> (N, 2) ---
    x = jax.random.normal(kx, (1, N, F_IN), jnp.float32)
    out = jax.block_until_ready(mixing_network_forward(x, padded_params))
    ref = reference_forward(x, w1, b1, w2, b2)
    assert out.shape == (N, F_OUT)
    assert jnp.allclose(out, ref, atol=1e-5, rtol=1e-5), (out, ref)

    # --- batched: B independent (N, 2) inputs in ONE pallas_call ---
    B = 16
    xb = jax.random.normal(kb, (B, N, F_IN), jnp.float32)
    outb = jax.block_until_ready(mixing_network_forward_batched(xb, padded_params))
    refb = jnp.stack([reference_forward(xb[i:i + 1], w1, b1, w2, b2)
                      for i in range(B)])
    assert outb.shape == (B, N, F_OUT)
    assert jnp.allclose(outb, refb, atol=1e-5, rtol=1e-5), (outb, refb)

    print("KERNEL_OK")
</pallas_src>

<mosaic_0001>
module attributes {stable_mosaic.version = 11 : i64} {
  func.func @mixing_kernel(%arg0: i32, %arg1: memref<1x8x8xf32, #tpu.memory_space<vmem>>, %arg2: memref<8x128xf32, #tpu.memory_space<vmem>>, %arg3: memref<1x128xf32, #tpu.memory_space<vmem>>, %arg4: memref<8x128xf32, #tpu.memory_space<vmem>>, %arg5: memref<1x128xf32, #tpu.memory_space<vmem>>, %arg6: memref<1x8x128xf32, #tpu.memory_space<vmem>>) attributes {dimension_semantics = [#tpu.dimension_semantics<parallel>], iteration_bounds = array<i64: 1>, scalar_prefetch = 0 : i64, scratch_operands = 0 : i64, tpu.core_type = #tpu.core_type<tc>, window_params = [{transform_indices = @transform_0, window_bounds = array<i64: 1, 8, 8>}, {pipeline_mode = #tpu.pipeline_mode<synchronous>, transform_indices = @transform_1, window_bounds = array<i64: 8, 128>}, {pipeline_mode = #tpu.pipeline_mode<synchronous>, transform_indices = @transform_2, window_bounds = array<i64: 1, 128>}, {pipeline_mode = #tpu.pipeline_mode<synchronous>, transform_indices = @transform_3, window_bounds = array<i64: 8, 128>}, {pipeline_mode = #tpu.pipeline_mode<synchronous>, transform_indices = @transform_4, window_bounds = array<i64: 1, 128>}, {transform_indices = @transform_5, window_bounds = array<i64: 1, 8, 128>}]} {
    %c0 = arith.constant 0 : index
    %c0_0 = arith.constant 0 : index
    %c0_1 = arith.constant 0 : index
    %0 = vector.load %arg1[%c0, %c0_0, %c0_1] : memref<1x8x8xf32, #tpu.memory_space<vmem>>, vector<1x8x8xf32>
    %1 = vector.shape_cast %0 : vector<1x8x8xf32> to vector<8x8xf32>
    %c0_2 = arith.constant 0 : index
    %c0_3 = arith.constant 0 : index
    %2 = vector.load %arg2[%c0_2, %c0_3] : memref<8x128xf32, #tpu.memory_space<vmem>>, vector<8x128xf32>
    %cst = arith.constant dense<0.000000e+00> : vector<8x128xf32>
    %3 = tpu.matmul %1, %2, %cst {dimension_numbers = #tpu.dot_dimension_numbers<[1], [0], [0], [1], [0, 0, 1, 1], [], []>} : vector<8x8xf32>, vector<8x128xf32>, vector<8x128xf32> -> vector<8x128xf32>
    %c0_4 = arith.constant 0 : index
    %c0_5 = arith.constant 0 : index
    %4 = vector.load %arg3[%c0_4, %c0_5] : memref<1x128xf32, #tpu.memory_space<vmem>>, vector<1x128xf32>
    %5 = vector.broadcast %4 : vector<1x128xf32> to vector<8x128xf32>
    %6 = arith.addf %3, %5 : vector<8x128xf32>
    %7 = tpu.iota {dimensions = array<i32: 0>} : vector<8x128xi32>
    %c1_i32 = arith.constant 1 : i32
    %8 = vector.broadcast %c1_i32 : i32 to vector<8x128xi32>
    %9 = arith.cmpi sge, %7, %8 : vector<8x128xi32>
    %10 = math.tanh %6 : vector<8x128xf32>
    %11 = arith.select %9, %10, %6 : vector<8x128xi1>, vector<8x128xf32>
    %12 = vector.extract_strided_slice %11 {offsets = [0, 0], sizes = [8, 8], strides = [1, 1]} : vector<8x128xf32> to vector<8x8xf32>
    %c0_6 = arith.constant 0 : index
    %c0_7 = arith.constant 0 : index
    %13 = vector.load %arg4[%c0_6, %c0_7] : memref<8x128xf32, #tpu.memory_space<vmem>>, vector<8x128xf32>
    %cst_8 = arith.constant dense<0.000000e+00> : vector<8x128xf32>
    %14 = tpu.matmul %12, %13, %cst_8 {dimension_numbers = #tpu.dot_dimension_numbers<[1], [0], [0], [1], [0, 0, 1, 1], [], []>} : vector<8x8xf32>, vector<8x128xf32>, vector<8x128xf32> -> vector<8x128xf32>
    %c0_9 = arith.constant 0 : index
    %c0_10 = arith.constant 0 : index
    %15 = vector.load %arg5[%c0_9, %c0_10] : memref<1x128xf32, #tpu.memory_space<vmem>>, vector<1x128xf32>
    %16 = vector.broadcast %15 : vector<1x128xf32> to vector<8x128xf32>
    %17 = arith.addf %14, %16 : vector<8x128xf32>
    %cst_11 = arith.constant dense<0xFF800000> : vector<128xf32>
    %18 = vector.multi_reduction <maximumf>, %17, %cst_11 [0] : vector<8x128xf32> to vector<128xf32>
    %19 = vector.shape_cast %18 : vector<128xf32> to vector<1x128xf32>
    %20 = vector.broadcast %19 : vector<1x128xf32> to vector<8x128xf32>
    %21 = arith.subf %17, %20 : vector<8x128xf32>
    %22 = math.exp %21 : vector<8x128xf32>
    %cst_12 = arith.constant dense<0.000000e+00> : vector<128xf32>
    %23 = vector.multi_reduction <add>, %22, %cst_12 [0] : vector<8x128xf32> to vector<128xf32>
    %24 = vector.shape_cast %23 : vector<128xf32> to vector<1x128xf32>
    %25 = tpu.reciprocal %24 : vector<1x128xf32> -> vector<1x128xf32>
    %26 = vector.broadcast %25 : vector<1x128xf32> to vector<8x128xf32>
    %27 = arith.mulf %22, %26 : vector<8x128xf32>
    %c0_13 = arith.constant 0 : index
    %c0_14 = arith.constant 0 : index
    %c0_15 = arith.constant 0 : index
    %28 = vector.load %arg6[%c0_13, %c0_14, %c0_15] : memref<1x8x128xf32, #tpu.memory_space<vmem>>, vector<1x8x128xf32>
    %29 = vector.shape_cast %28 : vector<1x8x128xf32> to vector<8x128xf32>
    %30 = vector.shape_cast %27 : vector<8x128xf32> to vector<1x8x128xf32>
    tpu.vector_store %arg6[%c0_13, %c0_14, %c0_15], %30 {strides = array<i32>} : memref<1x8x128xf32, #tpu.memory_space<vmem>>, vector<1x8x128xf32>,
    return
  }
  func.func @transform_0(%arg0: i32) -> (i32, i32, i32) {
    %c0_i32 = arith.constant 0 : i32
    %c0_i32_0 = arith.constant 0 : i32
    %c0_i32_1 = arith.constant 0 : i32
    return %arg0, %c0_i32, %c0_i32_0 : i32, i32, i32
  }
  func.func @transform_1(%arg0: i32) -> (i32, i32) {
    %c0_i32 = arith.constant 0 : i32
    %c0_i32_0 = arith.constant 0 : i32
    %c0_i32_1 = arith.constant 0 : i32
    return %c0_i32, %c0_i32_0 : i32, i32
  }
  func.func @transform_2(%arg0: i32) -> (i32, i32) {
    %c0_i32 = arith.constant 0 : i32
    %c0_i32_0 = arith.constant 0 : i32
    %c0_i32_1 = arith.constant 0 : i32
    return %c0_i32, %c0_i32_0 : i32, i32
  }
  func.func @transform_3(%arg0: i32) -> (i32, i32) {
    %c0_i32 = arith.constant 0 : i32
    %c0_i32_0 = arith.constant 0 : i32
    %c0_i32_1 = arith.constant 0 : i32
    return %c0_i32, %c0_i32_0 : i32, i32
  }
  func.func @transform_4(%arg0: i32) -> (i32, i32) {
    %c0_i32 = arith.constant 0 : i32
    %c0_i32_0 = arith.constant 0 : i32
    %c0_i32_1 = arith.constant 0 : i32
    return %c0_i32, %c0_i32_0 : i32, i32
  }
  func.func @transform_5(%arg0: i32) -> (i32, i32, i32) {
    %c0_i32 = arith.constant 0 : i32
    %c0_i32_0 = arith.constant 0 : i32
    %c0_i32_1 = arith.constant 0 : i32
    return %arg0, %c0_i32, %c0_i32_0 : i32, i32, i32
  }
}

</mosaic_0001>

<llo_original>
// kernel: mixing_network_forward_batched.1
$region0: #{mixing_network_forward_batched.1}
  #allocation0 [shape = 'u32[]', space=smem, size = 0x4, offset = 0x4, fixed_abs, tag = 'smem constant byte address 0x4 - core index']
  #allocation1 [shape = 'u32[144,128]{1,0:T(1,128)}', space=vmem, size = 0x12000, scoped, tag = 'internal scratch']
  %s0 = inlined_call_operand.vmem [shape: f32[1,8,8], index: 0, kind: input, shape index: {}]
  %s1 = inlined_call_operand.vmem [shape: f32[8,128], index: 1, kind: input, shape index: {}]
  %s2 = inlined_call_operand.vmem [shape: f32[1,128], index: 2, kind: input, shape index: {}]
  %s3 = inlined_call_operand.vmem [shape: f32[8,128], index: 3, kind: input, shape index: {}]
  %s4 = inlined_call_operand.vmem [shape: f32[1,128], index: 4, kind: input, shape index: {}]
  %s5 = inlined_call_operand.vmem [shape: f32[1,8,128], index: 5, kind: output, shape index: {}]
  %s6 = sld [smem:[#allocation0]]
  $region30: #{mixing_network_forward_batched.1} parent=0
    _
  %s8 = ssub.s32 1, %s6
  %s9 = scalar_select 0, %s8, %s6
  // Predicated region
  $region2: #{mixing_network_forward_batched.1} parent=0 // pred_check
    _
  $region3: #{mixing_network_forward_batched.1} parent=0 // pred_check_branch
    %11 = sbr.rel (0) target = $region5
  $region4: #{mixing_network_forward_batched.1} parent=0 // pred_region
    _
  $region5: #{mixing_network_forward_batched.1} parent=0 // pred_fallthru
    _
  // Predicated region
  $region6: #{mixing_network_forward_batched.1} parent=0 // pred_check
    _
  $region7: #{mixing_network_forward_batched.1} parent=0 // pred_check_branch
    %13 = sbr.rel (0) target = $region9
  $region8: #{mixing_network_forward_batched.1} parent=0 // pred_region
    _
  $region9: #{mixing_network_forward_batched.1} parent=0 // pred_fallthru
    _
  // Predicated region
  $region10: #{mixing_network_forward_batched.1} parent=0 // pred_check
    _
  $region11: #{mixing_network_forward_batched.1} parent=0 // pred_check_branch
    %15 = sbr.rel (0) target = $region13
  $region12: #{mixing_network_forward_batched.1} parent=0 // pred_region
    _
  $region13: #{mixing_network_forward_batched.1} parent=0 // pred_fallthru
    _
  // Predicated region
  $region14: #{mixing_network_forward_batched.1} parent=0 // pred_check
    _
  $region15: #{mixing_network_forward_batched.1} parent=0 // pred_check_branch
    %17 = sbr.rel (0) target = $region17
  $region16: #{mixing_network_forward_batched.1} parent=0 // pred_region
    _
  $region17: #{mixing_network_forward_batched.1} parent=0 // pred_fallthru
    _
  // Predicated region
  $region18: #{mixing_network_forward_batched.1} parent=0 // pred_check
    _
  $region19: #{mixing_network_forward_batched.1} parent=0 // pred_check_branch
    %19 = sbr.rel (0) target = $region21
  $region20: #{mixing_network_forward_batched.1} parent=0 // pred_region
    _
  $region21: #{mixing_network_forward_batched.1} parent=0 // pred_fallthru
    _
  %v20 = vld [vmem:[%s0] sm:$0xff]
  %v21 = vld [vmem:[%s1] sm:$0xff]
  %v22 = vld [vmem:[%s2] sm:$0x1]
  %v24 = vlaneseq
  %v25 = vshrl.u32 %v24, 7
  %v26 = vsub.s32 0, %v25
  %v27 = vrot.slane %v22, %v26
  %vm29 = vcmask 64512
  %v31 = vsel %vm29, %v20, 0
  %33 = vmatprep.subr.mxu0 0.0
  %34 = vmatpush1.msra.mxu0 0.0
  %35 = vmatprep.subr.mxu0 0.0
  %36 = vmatpush1.msra.mxu0 0.0
  %37 = vmatprep.subr.mxu0 0.0
  %38 = vmatpush1.msra.mxu0 0.0
  %39 = vmatprep.subr.mxu0 0.0
  %40 = vmatpush1.msra.mxu0 0.0
  %41 = vmatprep.subr.mxu0 0.0
  %42 = vmatpush1.msra.mxu0 0.0
  %43 = vmatprep.subr.mxu0 0.0
  %44 = vmatpush1.msra.mxu0 0.0
  %45 = vmatprep.subr.mxu0 0.0
  %46 = vmatpush1.msra.mxu0 0.0
  %47 = vmatprep.subr.mxu0 0.0
  %48 = vmatpush1.msra.mxu0 0.0
  %49 = vmatprep.subr.mxu0 0.0
  %50 = vmatpush1.msra.mxu0 0.0
  %51 = vmatprep.subr.mxu0 0.0
  %52 = vmatpush1.msra.mxu0 0.0
  %53 = vmatprep.subr.mxu0 0.0
  %54 = vmatpush1.msra.mxu0 0.0
  %55 = vmatprep.subr.mxu0 0.0
  %56 = vmatpush1.msra.mxu0 0.0
  %57 = vmatprep.subr.mxu0 0.0
  %58 = vmatpush1.msra.mxu0 0.0
  %59 = vmatprep.subr.mxu0 0.0
  %60 = vmatpush1.msra.mxu0 0.0
  %61 = vmatprep.subr.mxu0 0.0
  %62 = vmatpush1.msra.mxu0 0.0
  %63 = vmatprep.subr.mxu0 0.0
  %64 = vmatpush1.msra.mxu0 %v21
  %65 = vmatprep.subr.mxu0 0.0
  %66 = vmatpush2.msra.mxu0 0.0
  %67 = vmatprep.subr.mxu0 0.0
  %68 = vmatpush2.msra.mxu0 0.0
  %69 = vmatprep.subr.mxu0 0.0
  %70 = vmatpush2.msra.mxu0 0.0
  %71 = vmatprep.subr.mxu0 0.0
  %72 = vmatpush2.msra.mxu0 0.0
  %73 = vmatprep.subr.mxu0 0.0
  %74 = vmatpush2.msra.mxu0 0.0
  %75 = vmatprep.subr.mxu0 0.0
  %76 = vmatpush2.msra.mxu0 0.0
  %77 = vmatprep.subr.mxu0 0.0
  %78 = vmatpush2.msra.mxu0 0.0
  %79 = vmatprep.subr.mxu0 0.0
  %80 = vmatpush2.msra.mxu0 0.0
  %81 = vmatprep.subr.mxu0 0.0
  %82 = vmatpush2.msra.mxu0 0.0
  %83 = vmatprep.subr.mxu0 0.0
  %84 = vmatpush2.msra.mxu0 0.0
  %85 = vmatprep.subr.mxu0 0.0
  %86 = vmatpush2.msra.mxu0 0.0
  %87 = vmatprep.subr.mxu0 0.0
  %88 = vmatpush2.msra.mxu0 0.0
  %89 = vmatprep.subr.mxu0 0.0
  %90 = vmatpush2.msra.mxu0 0.0
  %91 = vmatprep.subr.mxu0 0.0
  %92 = vmatpush2.msra.mxu0 0.0
  %93 = vmatprep.subr.mxu0 0.0
  %94 = vmatpush2.msra.mxu0 0.0
  %95 = vmatprep.subr.mxu0 0.0
  %96 = vmatpush2.msra.mxu0 0.0
  %97 = vmatprep.mubr.f32.mxu0 0.0
  %98 = vmatmul.mubr.f32.gmra.mxu0 %v31
  %v99 = vpop.f32.mrf.mxu0
  %v100 = vadd.f32 %v27, %v99
  %v101 = vpop.f32.mrf.mxu0
  %102 = vdwg.mxu0
  %v103 = vlaneseq
  %v104 = vshrl.u32 %v103, 7
  %vm105 = vcmp.ge.s32.totalorder %v104, 1
  %v106 = vtanh.pop %v100
  %v107 = vsel %vm105, %v106, %v100
  %v108 = vld [vmem:[%s3] sm:$0xff]
  %v109 = vld [vmem:[%s4] sm:$0x1]
  %v111 = vlaneseq
  %v112 = vshrl.u32 %v111, 7
  %v113 = vsub.s32 0, %v112
  %v114 = vrot.slane %v109, %v113
  %v117 = vsel %vm29, %v107, 0
  %119 = vmatprep.subr.mxu0 0.0
  %120 = vmatpush1.msra.mxu0 0.0
  %121 = vmatprep.subr.mxu0 0.0
  %122 = vmatpush1.msra.mxu0 0.0
  %123 = vmatprep.subr.mxu0 0.0
  %124 = vmatpush1.msra.mxu0 0.0
  %125 = vmatprep.subr.mxu0 0.0
  %126 = vmatpush1.msra.mxu0 0.0
  %127 = vmatprep.subr.mxu0 0.0
  %128 = vmatpush1.msra.mxu0 0.0
  %129 = vmatprep.subr.mxu0 0.0
  %130 = vmatpush1.msra.mxu0 0.0
  %131 = vmatprep.subr.mxu0 0.0
  %132 = vmatpush1.msra.mxu0 0.0
  %133 = vmatprep.subr.mxu0 0.0
  %134 = vmatpush1.msra.mxu0 0.0
  %135 = vmatprep.subr.mxu0 0.0
  %136 = vmatpush1.msra.mxu0 0.0
  %137 = vmatprep.subr.mxu0 0.0
  %138 = vmatpush1.msra.mxu0 0.0
  %139 = vmatprep.subr.mxu0 0.0
  %140 = vmatpush1.msra.mxu0 0.0
  %141 = vmatprep.subr.mxu0 0.0
  %142 = vmatpush1.msra.mxu0 0.0
  %143 = vmatprep.subr.mxu0 0.0
  %144 = vmatpush1.msra.mxu0 0.0
  %145 = vmatprep.subr.mxu0 0.0
  %146 = vmatpush1.msra.mxu0 0.0
  %147 = vmatprep.subr.mxu0 0.0
  %148 = vmatpush1.msra.mxu0 0.0
  %149 = vmatprep.subr.mxu0 0.0
  %150 = vmatpush1.msra.mxu0 %v108
  %151 = vmatprep.subr.mxu0 0.0
  %152 = vmatpush2.msra.mxu0 0.0
  %153 = vmatprep.subr.mxu0 0.0
  %154 = vmatpush2.msra.mxu0 0.0
  %155 = vmatprep.subr.mxu0 0.0
  %156 = vmatpush2.msra.mxu0 0.0
  %157 = vmatprep.subr.mxu0 0.0
  %158 = vmatpush2.msra.mxu0 0.0
  %159 = vmatprep.subr.mxu0 0.0
  %160 = vmatpush2.msra.mxu0 0.0
  %161 = vmatprep.subr.mxu0 0.0
  %162 = vmatpush2.msra.mxu0 0.0
  %163 = vmatprep.subr.mxu0 0.0
  %164 = vmatpush2.msra.mxu0 0.0
  %165 = vmatprep.subr.mxu0 0.0
  %166 = vmatpush2.msra.mxu0 0.0
  %167 = vmatprep.subr.mxu0 0.0
  %168 = vmatpush2.msra.mxu0 0.0
  %169 = vmatprep.subr.mxu0 0.0
  %170 = vmatpush2.msra.mxu0 0.0
  %171 = vmatprep.subr.mxu0 0.0
  %172 = vmatpush2.msra.mxu0 0.0
  %173 = vmatprep.subr.mxu0 0.0
  %174 = vmatpush2.msra.mxu0 0.0
  %175 = vmatprep.subr.mxu0 0.0
  %176 = vmatpush2.msra.mxu0 0.0
  %177 = vmatprep.subr.mxu0 0.0
  %178 = vmatpush2.msra.mxu0 0.0
  %179 = vmatprep.subr.mxu0 0.0
  %180 = vmatpush2.msra.mxu0 0.0
  %181 = vmatprep.subr.mxu0 0.0
  %182 = vmatpush2.msra.mxu0 0.0
  %183 = vmatprep.mubr.f32.mxu0 0.0
  %184 = vmatmul.mubr.f32.gmra.mxu0 %v117
  %v185 = vpop.f32.mrf.mxu0
  %v186 = vadd.f32 %v114, %v185
  %v187 = vpop.f32.mrf.mxu0
  %188 = vdwg.mxu0
  %v189 = vrot.slane %v186, 4
  %v190 = vmax.f32 %v186, %v189
  %v191 = vrot.slane %v190, 2
  %v192 = vmax.f32 %v190, %v191
  %v193 = vrot.slane %v192, 1
  %v194 = vmax.f32 %v192, %v193
  %v195 = vsub.f32 %v186, %v194
  %v196 = vmul.f32 %v195, 1.442695
  %v197 = vpow.pop %v196
  %v198 = vrot.slane %v197, 4
  %v199 = vadd.f32 %v197, %v198
  %v200 = vrot.slane %v199, 2
  %v201 = vadd.f32 %v199, %v200
  %v202 = vrot.slane %v201, 1
  %v203 = vadd.f32 %v201, %v202
  %v204 = vrcp.pop %v203
  %v205 = vmul.f32 %v197, %v204
  %206 = vst [vmem:[%s5] sm:$0xff] %v205
  // Predicated region
  $region22: #{mixing_network_forward_batched.1} parent=0 // pred_check
    _
  $region23: #{mixing_network_forward_batched.1} parent=0 // pred_check_branch
    %208 = sbr.rel (0) target = $region25
  $region24: #{mixing_network_forward_batched.1} parent=0 // pred_region
    _
  $region25: #{mixing_network_forward_batched.1} parent=0 // pred_fallthru
    _
  // Predicated region
  $region26: #{mixing_network_forward_batched.1} parent=0 // pred_check
    _
  $region27: #{mixing_network_forward_batched.1} parent=0 // pred_check_branch
    %210 = sbr.rel (0) target = $region29
  $region28: #{mixing_network_forward_batched.1} parent=0 // pred_region
    _
  $region29: #{mixing_network_forward_batched.1} parent=0 // pred_fallthru
    _

</llo_original>
